<compile_context>
chip_gen: v7x
topology: tpu7x:2x2x1
jax: 0.10.0
libtpu: 0.0.40
codegen_flags: <defaults>
</compile_context>

<pallas_src>
import functools

import jax
import jax.numpy as jnp
from jax.experimental import pallas as pl
from jax.experimental.pallas import tpu as pltpu


def _wrp_loss_kernel(margin_ref, scores_ref, targets_ref, out_ref, *,
                     true_b, tb, tiles_per_split):
    split = pl.program_id(0)      # "parallel" axis: megacore batch split
    i = pl.program_id(1)          # "arbitrary" axis: batch tiles of this split

    # Zero this split's resident accumulator block at its first tile.
    @pl.when(i == 0)
    def _init():
        out_ref[...] = jnp.zeros_like(out_ref)

    margin = margin_ref[0]
    s = scores_ref[...].astype(jnp.float32)             # (TB, C), f32 math
    t = targets_ref[...]                                 # (TB, 1) int32

    n_cls = s.shape[-1]
    col = jax.lax.broadcasted_iota(jnp.int32, (1, n_cls), 1)   # (1, C)
    col_f = col.astype(jnp.float32)

    # Ground-truth score gather (torch.gather(scores, 1, targets)).
    is_gt = col == t                                      # (TB, C)
    gt_score = jnp.sum(jnp.where(is_gt, s, 0.0), axis=-1, keepdims=True)  # (TB,1)

    # diff = s_y - s_gt is exactly 0 at the ground-truth column, so the gt
    # column is removed with exact scalar corrections instead of a full-tile
    # select:
    #   hinge = sum_y relu(margin + diff_y)  - relu(margin)
    #   n_pos = #{y : margin + diff_y > 0}   - 1{margin > 0}
    #   rank  = 1 + #{y : diff_y > 0}
    diff = s - gt_score                                   # (TB, C)
    loss_el = jnp.maximum(diff + margin, 0.0)             # (TB, C)

    hinge = (jnp.sum(loss_el, axis=-1, keepdims=True)
             - jnp.maximum(margin, 0.0))                  # (TB, 1)
    n_pos = (jnp.sum((diff > -margin).astype(jnp.float32),
                     axis=-1, keepdims=True)
             - (margin > 0.0).astype(jnp.float32) + 1e-07)  # (TB, 1)
    rank_f = jnp.sum((diff > 0.0).astype(jnp.float32),
                     axis=-1, keepdims=True) + 1.0          # (TB, 1)

    # Harmonic rank weight H(rank) = sum_{j=1..rank} 1/j (1/j row is (1, C)).
    inv = 1.0 / (col_f + 1.0)                             # (1, C)
    harm = jnp.sum(jnp.where(col_f < rank_f, inv, 0.0),
                   axis=-1, keepdims=True)                # (TB, 1)

    per_sample = harm / n_pos * hinge                     # (TB, 1)

    tile_start = (split * tiles_per_split + i) * tb

    # Full tiles skip the row mask entirely; only tiles that can contain
    # padded rows (batch padded to a multiple of n_split*tiles_per_split*tb)
    # pay for the iota + compare + select.
    @pl.when(tile_start + tb <= true_b)
    def _full_tile():
        out_ref[...] += jnp.sum(per_sample)

    @pl.when(tile_start + tb > true_b)
    def _tail_tile():
        row = jax.lax.broadcasted_iota(jnp.int32, per_sample.shape, 0) + tile_start
        out_ref[...] += jnp.sum(jnp.where(row < true_b, per_sample, 0.0))


def _choose_batch_tile(B, C):
    # ~2 MiB of f32 working set per (TB, C) tile; TB a multiple of 16
    # (native bf16 sublane packing); no fixed row cap.
    bytes_per_row_f32 = max(C, 1) * 4
    tb = (2 * 1024 * 1024) // bytes_per_row_f32
    tb = max(16, (tb // 16) * 16)
    b_round16 = ((B + 15) // 16) * 16
    return min(tb, b_round16)


def weighted_rank_pairwise_loss(scores, targets, W=None, *, margin=1.0,
                                reg_lambda=1.0):
    """scores: (B, C) float (any dtype), targets: (B,) int.  Returns scalar f32."""
    B, C = scores.shape
    targets2d = targets.astype(jnp.int32).reshape(B, 1)

    tb = _choose_batch_tile(B, C)
    num_tiles = -(-B // tb)                    # cdiv
    # Two-way batch split along a "parallel" grid axis: on v7x the halves run
    # on the two TensorCores; on v5e/v6e the axis just runs serially.
    n_split = 2 if num_tiles >= 2 else 1
    tiles_per_split = -(-num_tiles // n_split)
    b_pad = n_split * tiles_per_split * tb

    if b_pad != B:
        scores_p = jnp.pad(scores, ((0, b_pad - B), (0, 0)))
        targets_p = jnp.pad(targets2d, ((0, b_pad - B), (0, 0)))
    else:
        scores_p, targets_p = scores, targets2d

    margin_arr = jnp.asarray([margin], dtype=jnp.float32)
    kernel = functools.partial(_wrp_loss_kernel, true_b=B, tb=tb,
                               tiles_per_split=tiles_per_split)

    partial_blocks = pl.pallas_call(
        kernel,
        out_shape=jax.ShapeDtypeStruct((n_split, 8, 128), jnp.float32),
        grid=(n_split, tiles_per_split),
        in_specs=[
            pl.BlockSpec(memory_space=pltpu.SMEM),               # margin scalar
            pl.BlockSpec((tb, C), lambda sp, i: (sp * tiles_per_split + i, 0)),
            pl.BlockSpec((tb, 1), lambda sp, i: (sp * tiles_per_split + i, 0)),
        ],
        # One resident (8,128) accumulator block per split; written back once.
        out_specs=pl.BlockSpec((1, 8, 128), lambda sp, i: (sp, 0, 0)),
        compiler_params=pltpu.CompilerParams(
            dimension_semantics=("parallel", "arbitrary"),
            vmem_limit_bytes=32 * 1024 * 1024,   # safe on v7x (64 MiB physical)
        ),
    )(margin_arr, scores_p, targets_p)

    # Every element of a split's block holds that split's partial batch sum.
    loss = jnp.sum(partial_blocks[:, 0, 0]) / B

    if W is not None:
        # plain-JAX glue: reg_lambda * sum ||param||^2
        params = W if isinstance(W, (list, tuple)) else [W]
        param_norm = sum(jnp.sum(jnp.square(p.astype(jnp.float32))) for p in params)
        loss = loss + reg_lambda * param_norm
    return loss


def _reference(scores, targets, W=None, margin=1.0, reg_lambda=1.0):
    """Pure-JAX reference mirroring the PyTorch module (f32 math)."""
    scores = scores.astype(jnp.float32)
    B, C = scores.shape
    col = jnp.arange(C)[None, :]
    t = targets[:, None]
    is_gt = col == t
    gt = jnp.sum(jnp.where(is_gt, scores, 0.0), axis=-1, keepdims=True)
    maskf = (~is_gt).astype(jnp.float32)
    raw = (maskf * margin + scores - gt) * maskf
    pos = (raw > 0).astype(jnp.float32)
    hinge = jnp.sum(raw * pos, axis=-1)
    n_pos = jnp.sum(pos, axis=-1) + 1e-07
    rank = jnp.sum((scores > gt).astype(jnp.int32), axis=-1) + 1
    harm = jnp.sum(jnp.where(col + 1 <= rank[:, None], 1.0 / (col + 1.0), 0.0),
                   axis=-1)
    loss = jnp.mean(harm / n_pos * hinge)
    if W is not None:
        params = W if isinstance(W, (list, tuple)) else [W]
        loss = loss + reg_lambda * sum(
            jnp.sum(jnp.square(p.astype(jnp.float32))) for p in params)
    return loss


if __name__ == "__main__":
    key = jax.random.PRNGKey(0)
    k1, k2, k3, k4, k5, k6, k7 = jax.random.split(key, 7)

    # Test 1: small f32 scores with optional regularizer W (single tile).
    B, C = 8, 32
    scores = jax.random.normal(k1, (B, C), dtype=jnp.float32)
    targets = jax.random.randint(k2, (B,), 0, C, dtype=jnp.int32)
    W = jax.random.normal(k3, (16, 8), dtype=jnp.float32) * 0.01

    out = weighted_rank_pairwise_loss(scores, targets, W, margin=1.0, reg_lambda=1.0)
    out = jax.block_until_ready(out)
    ref = _reference(scores, targets, W, margin=1.0, reg_lambda=1.0)
    assert jnp.allclose(out, ref, rtol=1e-5, atol=1e-5), (out, ref)

    # Test 2: bf16 scores (native-dtype DMA), ragged batch -> padded tail tile.
    B2, C2 = 13, 40
    scores2 = jax.random.normal(k4, (B2, C2), dtype=jnp.bfloat16)
    targets2 = jax.random.randint(k5, (B2,), 0, C2, dtype=jnp.int32)

    out2 = weighted_rank_pairwise_loss(scores2, targets2, None, margin=0.5)
    out2 = jax.block_until_ready(out2)
    ref2 = _reference(scores2, targets2, None, margin=0.5)
    assert jnp.allclose(out2, ref2, rtol=1e-4, atol=1e-4), (out2, ref2)

    # Test 3: larger batch -> multi-tile grid + 2-way parallel split path.
    B3, C3 = 4096, 1024
    scores3 = jax.random.normal(k6, (B3, C3), dtype=jnp.float32)
    targets3 = jax.random.randint(k7, (B3,), 0, C3, dtype=jnp.int32)

    out3 = weighted_rank_pairwise_loss(scores3, targets3, None, margin=1.0)
    out3 = jax.block_until_ready(out3)
    ref3 = _reference(scores3, targets3, None, margin=1.0)
    assert jnp.allclose(out3, ref3, rtol=1e-4, atol=1e-4), (out3, ref3)

    print("KERNEL_OK")
</pallas_src>

<mosaic_0001>
module attributes {stable_mosaic.version = 11 : i64} {
  func.func @_wrp_loss_kernel(%arg0: i32, %arg1: i32, %arg2: memref<1xf32, #tpu.memory_space<smem>>, %arg3: memref<16x32xf32, #tpu.memory_space<vmem>>, %arg4: memref<16x1xi32, #tpu.memory_space<vmem>>, %arg5: memref<1x8x128xf32, #tpu.memory_space<vmem>>) attributes {dimension_semantics = [#tpu.dimension_semantics<parallel>, #tpu.dimension_semantics<arbitrary>], iteration_bounds = array<i64: 1, 1>, scalar_prefetch = 0 : i64, scratch_operands = 0 : i64, tpu.core_type = #tpu.core_type<tc>, window_params = [{transform_indices = @transform_0, window_bounds = array<i64: 1>}, {transform_indices = @transform_1, window_bounds = array<i64: 16, 32>}, {transform_indices = @transform_2, window_bounds = array<i64: 16, 1>}, {transform_indices = @transform_3, window_bounds = array<i64: 1, 8, 128>}]} {
    %c0_i32 = arith.constant 0 : i32
    %0 = arith.cmpi eq, %arg1, %c0_i32 : i32
    %1 = arith.extui %0 : i1 to i32
    %c0_i32_0 = arith.constant 0 : i32
    %2 = arith.cmpi ne, %1, %c0_i32_0 : i32
    scf.if %2 {
      %cst_25 = arith.constant 0.000000e+00 : f32
      %74 = vector.broadcast %cst_25 : f32 to vector<1x8x128xf32>
      %c0_26 = arith.constant 0 : index
      %c0_27 = arith.constant 0 : index
      %c0_28 = arith.constant 0 : index
      %75 = vector.load %arg5[%c0_26, %c0_27, %c0_28] : memref<1x8x128xf32, #tpu.memory_space<vmem>>, vector<1x8x128xf32>
      tpu.vector_store %arg5[%c0_26, %c0_27, %c0_28], %74 {strides = array<i32>} : memref<1x8x128xf32, #tpu.memory_space<vmem>>, vector<1x8x128xf32>,
    } else {
    }
    %c0 = arith.constant 0 : index
    %3 = memref.load %arg2[%c0] : memref<1xf32, #tpu.memory_space<smem>>
    %c0_1 = arith.constant 0 : index
    %c0_2 = arith.constant 0 : index
    %4 = vector.load %arg3[%c0_1, %c0_2] : memref<16x32xf32, #tpu.memory_space<vmem>>, vector<16x32xf32>
    %c0_3 = arith.constant 0 : index
    %c0_4 = arith.constant 0 : index
    %5 = vector.load %arg4[%c0_3, %c0_4] : memref<16x1xi32, #tpu.memory_space<vmem>>, vector<16x1xi32>
    %6 = tpu.iota {dimensions = array<i32: 1>} : vector<1x32xi32>
    %7 = arith.sitofp %6 : vector<1x32xi32> to vector<1x32xf32>
    %8 = vector.broadcast %6 : vector<1x32xi32> to vector<16x32xi32>
    %9 = vector.broadcast %5 : vector<16x1xi32> to vector<16x32xi32>
    %10 = arith.cmpi eq, %8, %9 : vector<16x32xi32>
    %cst = arith.constant 0.000000e+00 : f32
    %11 = vector.broadcast %cst : f32 to vector<16x32xf32>
    %12 = arith.select %10, %4, %11 : vector<16x32xi1>, vector<16x32xf32>
    %cst_5 = arith.constant dense<0.000000e+00> : vector<16xf32>
    %13 = vector.multi_reduction <add>, %12, %cst_5 [1] : vector<16x32xf32> to vector<16xf32>
    %14 = vector.shape_cast %13 : vector<16xf32> to vector<16x1xf32>
    %15 = vector.broadcast %14 : vector<16x1xf32> to vector<16x32xf32>
    %16 = arith.subf %4, %15 : vector<16x32xf32>
    %17 = vector.broadcast %3 : f32 to vector<16x32xf32>
    %18 = arith.addf %16, %17 : vector<16x32xf32>
    %cst_6 = arith.constant 0.000000e+00 : f32
    %19 = vector.broadcast %cst_6 : f32 to vector<16x32xf32>
    %20 = arith.maximumf %18, %19 : vector<16x32xf32>
    %cst_7 = arith.constant dense<0.000000e+00> : vector<16xf32>
    %21 = vector.multi_reduction <add>, %20, %cst_7 [1] : vector<16x32xf32> to vector<16xf32>
    %22 = vector.shape_cast %21 : vector<16xf32> to vector<16x1xf32>
    %cst_8 = arith.constant 0.000000e+00 : f32
    %23 = arith.maximumf %3, %cst_8 : f32
    %24 = vector.broadcast %23 : f32 to vector<16x1xf32>
    %25 = arith.subf %22, %24 : vector<16x1xf32>
    %cst_9 = arith.constant 0.000000e+00 : f32
    %26 = arith.subf %cst_9, %3 : f32
    %27 = vector.broadcast %26 : f32 to vector<16x32xf32>
    %28 = arith.cmpf ogt, %16, %27 : vector<16x32xf32>
    %29 = arith.extui %28 : vector<16x32xi1> to vector<16x32xi32>
    %30 = arith.sitofp %29 : vector<16x32xi32> to vector<16x32xf32>
    %cst_10 = arith.constant dense<0.000000e+00> : vector<16xf32>
    %31 = vector.multi_reduction <add>, %30, %cst_10 [1] : vector<16x32xf32> to vector<16xf32>
    %32 = vector.shape_cast %31 : vector<16xf32> to vector<16x1xf32>
    %cst_11 = arith.constant 0.000000e+00 : f32
    %33 = arith.cmpf ogt, %3, %cst_11 : f32
    %34 = arith.extui %33 : i1 to i32
    %35 = arith.sitofp %34 : i32 to f32
    %36 = vector.broadcast %35 : f32 to vector<16x1xf32>
    %37 = arith.subf %32, %36 : vector<16x1xf32>
    %cst_12 = arith.constant 1.000000e-07 : f32
    %38 = vector.broadcast %cst_12 : f32 to vector<16x1xf32>
    %39 = arith.addf %37, %38 : vector<16x1xf32>
    %cst_13 = arith.constant 0.000000e+00 : f32
    %40 = vector.broadcast %cst_13 : f32 to vector<16x32xf32>
    %41 = arith.cmpf ogt, %16, %40 : vector<16x32xf32>
    %42 = arith.extui %41 : vector<16x32xi1> to vector<16x32xi32>
    %43 = arith.sitofp %42 : vector<16x32xi32> to vector<16x32xf32>
    %cst_14 = arith.constant dense<0.000000e+00> : vector<16xf32>
    %44 = vector.multi_reduction <add>, %43, %cst_14 [1] : vector<16x32xf32> to vector<16xf32>
    %45 = vector.shape_cast %44 : vector<16xf32> to vector<16x1xf32>
    %cst_15 = arith.constant 1.000000e+00 : f32
    %46 = vector.broadcast %cst_15 : f32 to vector<16x1xf32>
    %47 = arith.addf %45, %46 : vector<16x1xf32>
    %cst_16 = arith.constant 1.000000e+00 : f32
    %48 = vector.broadcast %cst_16 : f32 to vector<1x32xf32>
    %49 = arith.addf %7, %48 : vector<1x32xf32>
    %cst_17 = arith.constant 1.000000e+00 : f32
    %50 = vector.broadcast %cst_17 : f32 to vector<1x32xf32>
    %51 = arith.divf %50, %49 : vector<1x32xf32>
    %52 = vector.broadcast %7 : vector<1x32xf32> to vector<16x32xf32>
    %53 = vector.broadcast %47 : vector<16x1xf32> to vector<16x32xf32>
    %54 = arith.cmpf olt, %52, %53 : vector<16x32xf32>
    %cst_18 = arith.constant 0.000000e+00 : f32
    %55 = vector.shape_cast %51 : vector<1x32xf32> to vector<1x32xf32>
    %56 = vector.broadcast %55 : vector<1x32xf32> to vector<16x32xf32>
    %57 = vector.broadcast %cst_18 : f32 to vector<16x32xf32>
    %58 = arith.select %54, %56, %57 : vector<16x32xi1>, vector<16x32xf32>
    %cst_19 = arith.constant dense<0.000000e+00> : vector<16xf32>
    %59 = vector.multi_reduction <add>, %58, %cst_19 [1] : vector<16x32xf32> to vector<16xf32>
    %60 = vector.shape_cast %59 : vector<16xf32> to vector<16x1xf32>
    %61 = arith.divf %60, %39 : vector<16x1xf32>
    %62 = arith.mulf %61, %25 : vector<16x1xf32>
    %c1_i32 = arith.constant 1 : i32
    %63 = arith.muli %arg0, %c1_i32 : i32
    %64 = arith.addi %63, %arg1 : i32
    %c16_i32 = arith.constant 16 : i32
    %65 = arith.muli %64, %c16_i32 : i32
    %c16_i32_20 = arith.constant 16 : i32
    %66 = arith.addi %65, %c16_i32_20 : i32
    %c8_i32 = arith.constant 8 : i32
    %67 = arith.cmpi sle, %66, %c8_i32 : i32
    %68 = arith.extui %67 : i1 to i32
    %c0_i32_21 = arith.constant 0 : i32
    %69 = arith.cmpi ne, %68, %c0_i32_21 : i32
    scf.if %69 {
      %c0_25 = arith.constant 0 : index
      %c0_26 = arith.constant 0 : index
      %c0_27 = arith.constant 0 : index
      %74 = vector.load %arg5[%c0_25, %c0_26, %c0_27] : memref<1x8x128xf32, #tpu.memory_space<vmem>>, vector<1x8x128xf32>
      %75 = vector.shape_cast %62 : vector<16x1xf32> to vector<1x16x1xf32>
      %cst_28 = arith.constant dense<0.000000e+00> : vector<1xf32>
      %76 = vector.multi_reduction <add>, %75, %cst_28 [1, 2] : vector<1x16x1xf32> to vector<1xf32>
      %77 = vector.shape_cast %76 : vector<1xf32> to vector<1x1x1xf32>
      %78 = vector.extract %77[0, 0, 0] : f32 from vector<1x1x1xf32>
      %79 = vector.broadcast %78 : f32 to vector<1x8x128xf32>
      %80 = arith.addf %74, %79 : vector<1x8x128xf32>
      %c0_29 = arith.constant 0 : index
      %c0_30 = arith.constant 0 : index
      %c0_31 = arith.constant 0 : index
      %81 = vector.load %arg5[%c0_29, %c0_30, %c0_31] : memref<1x8x128xf32, #tpu.memory_space<vmem>>, vector<1x8x128xf32>
      tpu.vector_store %arg5[%c0_29, %c0_30, %c0_31], %80 {strides = array<i32>} : memref<1x8x128xf32, #tpu.memory_space<vmem>>, vector<1x8x128xf32>,
    } else {
    }
    %c16_i32_22 = arith.constant 16 : i32
    %70 = arith.addi %65, %c16_i32_22 : i32
    %c8_i32_23 = arith.constant 8 : i32
    %71 = arith.cmpi sgt, %70, %c8_i32_23 : i32
    %72 = arith.extui %71 : i1 to i32
    %c0_i32_24 = arith.constant 0 : i32
    %73 = arith.cmpi ne, %72, %c0_i32_24 : i32
    scf.if %73 {
      %74 = tpu.iota {dimensions = array<i32: 0>} : vector<16x1xi32>
      %75 = vector.broadcast %65 : i32 to vector<16x1xi32>
      %76 = arith.addi %74, %75 : vector<16x1xi32>
      %c0_25 = arith.constant 0 : index
      %c0_26 = arith.constant 0 : index
      %c0_27 = arith.constant 0 : index
      %77 = vector.load %arg5[%c0_25, %c0_26, %c0_27] : memref<1x8x128xf32, #tpu.memory_space<vmem>>, vector<1x8x128xf32>
      %c8_i32_28 = arith.constant 8 : i32
      %78 = vector.broadcast %c8_i32_28 : i32 to vector<16x1xi32>
      %79 = arith.cmpi slt, %76, %78 : vector<16x1xi32>
      %cst_29 = arith.constant 0.000000e+00 : f32
      %80 = vector.broadcast %cst_29 : f32 to vector<16x1xf32>
      %81 = arith.select %79, %62, %80 : vector<16x1xi1>, vector<16x1xf32>
      %82 = vector.shape_cast %81 : vector<16x1xf32> to vector<1x16x1xf32>
      %cst_30 = arith.constant dense<0.000000e+00> : vector<1xf32>
      %83 = vector.multi_reduction <add>, %82, %cst_30 [1, 2] : vector<1x16x1xf32> to vector<1xf32>
      %84 = vector.shape_cast %83 : vector<1xf32> to vector<1x1x1xf32>
      %85 = vector.extract %84[0, 0, 0] : f32 from vector<1x1x1xf32>
      %86 = vector.broadcast %85 : f32 to vector<1x8x128xf32>
      %87 = arith.addf %77, %86 : vector<1x8x128xf32>
      %c0_31 = arith.constant 0 : index
      %c0_32 = arith.constant 0 : index
      %c0_33 = arith.constant 0 : index
      %88 = vector.load %arg5[%c0_31, %c0_32, %c0_33] : memref<1x8x128xf32, #tpu.memory_space<vmem>>, vector<1x8x128xf32>
      tpu.vector_store %arg5[%c0_31, %c0_32, %c0_33], %87 {strides = array<i32>} : memref<1x8x128xf32, #tpu.memory_space<vmem>>, vector<1x8x128xf32>,
    } else {
    }
    return
  }
  func.func @transform_0(%arg0: i32, %arg1: i32) -> i32 {
    %c0_i32 = arith.constant 0 : i32
    %c0_i32_0 = arith.constant 0 : i32
    return %c0_i32 : i32
  }
  func.func @transform_1(%arg0: i32, %arg1: i32) -> (i32, i32) {
    %c1_i32 = arith.constant 1 : i32
    %0 = arith.muli %arg0, %c1_i32 : i32
    %1 = arith.addi %0, %arg1 : i32
    %c0_i32 = arith.constant 0 : i32
    %c0_i32_0 = arith.constant 0 : i32
    return %1, %c0_i32 : i32, i32
  }
  func.func @transform_2(%arg0: i32, %arg1: i32) -> (i32, i32) {
    %c1_i32 = arith.constant 1 : i32
    %0 = arith.muli %arg0, %c1_i32 : i32
    %1 = arith.addi %0, %arg1 : i32
    %c0_i32 = arith.constant 0 : i32
    %c0_i32_0 = arith.constant 0 : i32
    return %1, %c0_i32 : i32, i32
  }
  func.func @transform_3(%arg0: i32, %arg1: i32) -> (i32, i32, i32) {
    %c0_i32 = arith.constant 0 : i32
    %c0_i32_0 = arith.constant 0 : i32
    %c0_i32_1 = arith.constant 0 : i32
    return %arg0, %c0_i32, %c0_i32_0 : i32, i32, i32
  }
}

</mosaic_0001>

<llo_original>
// kernel: tpu_custom_call.1
$region0: #{tpu_custom_call.1}
  #allocation0 [shape = 'u32[]', space=smem, size = 0x4, offset = 0x4, fixed_abs, tag = 'smem constant byte address 0x4 - core index']
  #allocation1 [shape = 'u32[144,128]{1,0:T(1,128)}', space=vmem, size = 0x12000, scoped, tag = 'internal scratch']
  #allocation2 [shape = 'f32[1]{0:T(128)S(6)}', space=smem, size = 0x200, scoped, tag = 'scoped memory for tpu_custom_call.1']
  %s0 = inlined_call_operand.<no memory space> [shape: f32[1], index: 0, kind: input, shape index: {}]
  %s1 = inlined_call_operand.vmem [shape: f32[16,32], index: 1, kind: input, shape index: {}]
  %s2 = inlined_call_operand.vmem [shape: s32[16,1], index: 2, kind: input, shape index: {}]
  %s3 = inlined_call_operand.hbm [shape: f32[1,8,128], index: 3, kind: output, shape index: {}]
  %s4 = sld [smem:[#allocation0]]
  $region34: #{tpu_custom_call.1} parent=0
    _
  %s6 = ssub.s32 1, %s4
  %s7 = scalar_select 0, %s6, %s4
  %8 = sst [smem:[#allocation2]] %s0
  $region1: #{tpu_custom_call.1} parent=0
    #allocation3 [shape = 'u8[4096]{0}', space=vmem, size = 0x1000, scoped, tag = 'output window, operand 0, single buffered']
    #allocation4 [shape = 's32[1]{0}', space=sflag, size = 0x4, scoped, tag = 'scoped memory for tpu_custom_call.1']
    %9 = vsyncpa [#allocation4], 0
    // Predicated region
    $region2: #{tpu_custom_call.1} parent=1 // pred_check
      _
    $region3: #{tpu_custom_call.1} parent=1 // pred_check_branch
      %11 = sbr.rel (0) target = $region5
    $region4: #{tpu_custom_call.1} parent=1 // pred_region
      _
    $region5: #{tpu_custom_call.1} parent=1 // pred_fallthru
      _
    // Predicated region
    $region6: #{tpu_custom_call.1} parent=1 // pred_check
      _
    $region7: #{tpu_custom_call.1} parent=1 // pred_check_branch
      %13 = sbr.rel (0) target = $region9
    $region8: #{tpu_custom_call.1} parent=1 // pred_region
      %s14 = sadd.s32 0, 0
      %s15 = smul.u32 2, %s14
      %p16 = scmp.lt.s32.totalorder %s15, 1
      %s17 = scalar_select %p16, %s15, 1
      %s18 = smul.addr %s17, 8
      %s19 = scalar_lea.vmem %s1, %s18
      %s20 = sadd.s32 0, 0
      %s21 = smul.u32 2, %s20
    $region9: #{tpu_custom_call.1} parent=1 // pred_fallthru
      _
    // Predicated region
    $region10: #{tpu_custom_call.1} parent=1 // pred_check
      _
    $region11: #{tpu_custom_call.1} parent=1 // pred_check_branch
      %23 = sbr.rel (0) target = $region13
    $region12: #{tpu_custom_call.1} parent=1 // pred_region
      %s24 = sadd.s32 0, 0
      %s25 = smul.u32 2, %s24
      %p26 = scmp.lt.s32.totalorder %s25, 1
      %s27 = scalar_select %p26, %s25, 1
      %s28 = smul.addr %s27, 8
      %s29 = scalar_lea.vmem %s2, %s28
      %s30 = sadd.s32 0, 0
      %s31 = smul.u32 2, %s30
    $region13: #{tpu_custom_call.1} parent=1 // pred_fallthru
      _
    %s32 = sadd.s32 0, 0
    %s33 = smul.u32 2, %s32
    %p34 = scmp.lt.s32.totalorder %s33, 1
    %s35 = scalar_select %p34, %s33, 1
    %s36 = smul.addr %s35, 8
    %s37 = scalar_lea.vmem %s1, %s36
    %s38 = sadd.s32 0, 0
    %s39 = smul.u32 2, %s38
    %p40 = scmp.lt.s32.totalorder %s39, 1
    %s41 = scalar_select %p40, %s39, 1
    %s42 = smul.addr %s41, 8
    %s43 = scalar_lea.vmem %s2, %s42
    %s44 = sadd.s32 0, 0
    %s45 = smul.u32 2, %s44
    %p46 = scmp.lt.s32.totalorder %s45, 1
    %s47 = scalar_select %p46, %s45, 1
    %s48 = smul.addr %s47, 8
    %s49 = scalar_lea.vmem %s1, %s48
    %s50 = sadd.s32 0, 0
    %s51 = smul.u32 2, %s50
    %s52 = sadd.s32 0, 0
    %s53 = smul.u32 2, %s52
    %p54 = scmp.lt.s32.totalorder %s53, 1
    %s55 = scalar_select %p54, %s53, 1
    %s56 = smul.addr %s55, 8
    %s57 = scalar_lea.vmem %s2, %s56
    %s58 = sadd.s32 0, 0
    %s59 = smul.u32 2, %s58
    %p60 = scmp.eq.s32.totalorder 0, 0
    // Predicated region
    $region14: #{tpu_custom_call.1} parent=1 // pred_check
      %p61 = pneg %p60
    $region15: #{tpu_custom_call.1} parent=1 // pred_check_branch
      %63 = sbr.rel (%p61) target = $region17
    $region16: #{tpu_custom_call.1} parent=1 // pred_region
      %64 = vst [vmem:[#allocation3] sm:$0xff] 0.0
    $region17: #{tpu_custom_call.1} parent=1 // pred_fallthru
      _
    %s65 = sld [smem:[#allocation2]]
    %v66 = vld [vmem:[%s49] sm:$0xff]
    %v67 = vld [vmem:[%s49 + $0x8] sm:$0xff]
    %v68 = vld [vmem:[%s57] sm:$0xff]
    %v69 = vld [vmem:[%s57 + $0x8] sm:$0xff]
    %v70 = vlaneseq
    %v71 = vand.u32 %v70, 127
    %v72 = vcvt.s32.f32 %v71
    %73 = vset.pattern.permute.xlu0 0
    %74 = vperm.xlu0 %73, %v68
    %v75 = vpop.permute.xlu0 %74
    %76 = vset.pattern.permute.xlu0 0
    %77 = vperm.xlu0 %76, %v69
    %v78 = vpop.permute.xlu0 %77
    %vm79 = vcmp.eq.s32.totalorder %v71, %v75
    %vm80 = vcmp.eq.s32.totalorder %v71, %v78
    %v81 = vsel %vm79, %v66, 0.0
    %v82 = vsel %vm80, %v67, 0.0
    %vm83 = vcmask 261120
    %v84 = vsel %vm83, %v81, 0.0
    %85 = vadd.xlane.f32.xlu0 %v84
    %v86 = vpop.xlane.xlu0 %85
    %v87 = vsel %vm83, %v82, 0.0
    %88 = vadd.xlane.f32.xlu0 %v87
    %v89 = vpop.xlane.xlu0 %88
    %v90 = vsub.f32 %v66, %v86
    %v91 = vsub.f32 %v67, %v89
    %v92 = vstv %s65
    %v93 = vadd.f32 %v90, %v92
    %v94 = vadd.f32 %v91, %v92
    %v95 = vmax.f32 %v93, 0.0
    %v96 = vmax.f32 %v94, 0.0
    %v97 = vsel %vm83, %v95, 0.0
    %98 = vadd.xlane.f32.xlu0 %v97
    %v99 = vpop.xlane.xlu0 %98
    %v100 = vsel %vm83, %v96, 0.0
    %101 = vadd.xlane.f32.xlu0 %v100
    %v102 = vpop.xlane.xlu0 %101
    %s103 = smax.f32 %s65, 0.0
    %v104 = vstv %s103
    %v105 = vsub.f32 %v99, %v104
    %v106 = vsub.f32 %v102, %v104
    %s107 = ssub.f32 0.0, %s65
    %v108 = vstv %s107
    %vm109 = vcmp.gt.f32.partialorder %v90, %v108
    %vm110 = vcmp.gt.f32.partialorder %v91, %v108
    %v111 = vsel %vm109, 1, 0
    %v112 = vsel %vm110, 1, 0
    %v113 = vcvt.s32.f32 %v111
    %v114 = vcvt.s32.f32 %v112
    %v115 = vsel %vm83, %v113, 0.0
    %116 = vadd.xlane.f32.xlu0 %v115
    %v117 = vpop.xlane.xlu0 %116
    %v118 = vsel %vm83, %v114, 0.0
    %119 = vadd.xlane.f32.xlu0 %v118
    %v120 = vpop.xlane.xlu0 %119
    %p121 = scmp.gt.f32.partialorder %s65, 0.0
    %s122 = scalar_select %p121, 1, 0
    %s123 = scvt.s32.f32 %s122
    %v124 = vstv %s123
    %v125 = vsub.f32 %v117, %v124
    %v126 = vsub.f32 %v120, %v124
    %v127 = vadd.f32 %v125, 1e-07
    %v128 = vadd.f32 %v126, 1e-07
    %vm129 = vcmp.gt.f32.partialorder %v90, 0.0
    %vm130 = vcmp.gt.f32.partialorder %v91, 0.0
    %v131 = vsel %vm129, 1, 0
    %v132 = vsel %vm130, 1, 0
    %v133 = vcvt.s32.f32 %v131
    %v134 = vcvt.s32.f32 %v132
    %v135 = vsel %vm83, %v133, 0.0
    %136 = vadd.xlane.f32.xlu0 %v135
    %v137 = vpop.xlane.xlu0 %136
    %v138 = vsel %vm83, %v134, 0.0
    %139 = vadd.xlane.f32.xlu0 %v138
    %v140 = vpop.xlane.xlu0 %139
    %v141 = vadd.f32 %v137, 1.0
    %v142 = vadd.f32 %v140, 1.0
    %v143 = vadd.f32 %v72, 1.0
    %v144 = vrcp.pop %v143
    %v145 = vmul.f32 1.0, %v144
    %vm146 = vcmp.lt.f32.partialorder %v72, %v141
    %vm147 = vcmp.lt.f32.partialorder %v72, %v142
    %v148 = vsel %vm146, %v145, 0.0
    %v149 = vsel %vm147, %v145, 0.0
    %v150 = vsel %vm83, %v148, 0.0
    %151 = vadd.xlane.f32.xlu0 %v150
    %v152 = vpop.xlane.xlu0 %151
    %v153 = vsel %vm83, %v149, 0.0
    %154 = vadd.xlane.f32.xlu0 %v153
    %v155 = vpop.xlane.xlu0 %154
    %v156 = vrcp.pop %v127
    %v157 = vmul.f32 %v152, %v156
    %v158 = vrcp.pop %v128
    %v159 = vmul.f32 %v155, %v158
    %v160 = vmul.f32 %v157, %v105
    %v161 = vmul.f32 %v159, %v106
    %s162 = sadd.s32 0, 0
    %s163 = smul.u32 %s162, 16
    %s164 = sadd.s32 %s163, 16
    %p165 = scmp.le.s32.totalorder %s164, 8
    // Predicated region
    $region18: #{tpu_custom_call.1} parent=1 // pred_check
      %p166 = pneg %p165
    $region19: #{tpu_custom_call.1} parent=1 // pred_check_branch
      %168 = sbr.rel (%p166) target = $region21
    $region20: #{tpu_custom_call.1} parent=1 // pred_region
      %v169 = vld [vmem:[#allocation3] sm:$0xff]
      %vm170 = vcmask 7168
      %v171 = vsel %vm170, %v160, 0.0
      %v172 = vsel %vm170, %v161, 0.0
      %v173 = vadd.f32 %v171, %v172
      %174 = vadd.xlane.f32.xlu0 %v173
      %v175 = vpop.xlane.xlu0 %174
      %v176 = vrot.slane %v175, 4
      %v177 = vadd.f32 %v175, %v176
      %v178 = vrot.slane %v177, 2
      %v179 = vadd.f32 %v177, %v178
      %v180 = vrot.slane %v179, 1
      %v181 = vadd.f32 %v179, %v180
      %s182 = vtos %v181
      %v183 = vstv %s182
      %v184 = vadd.f32 %v169, %v183
      %185 = vst [vmem:[#allocation3] sm:$0xff] %v184
    $region21: #{tpu_custom_call.1} parent=1 // pred_fallthru
      _
    %p186 = scmp.gt.s32.totalorder %s164, 8
    // Predicated region
    $region22: #{tpu_custom_call.1} parent=1 // pred_check
      %p187 = pneg %p186
    $region23: #{tpu_custom_call.1} parent=1 // pred_check_branch
      %189 = sbr.rel (%p187) target = $region25
    $region24: #{tpu_custom_call.1} parent=1 // pred_region
      %v190 = vlaneseq
      %v191 = vshrl.u32 %v190, 7
      %v192 = vadd.s32 %v191, 8
      %v193 = vstv %s163
      %v194 = vadd.s32 %v191, %v193
      %v195 = vadd.s32 %v192, %v193
      %v196 = vld [vmem:[#allocation3] sm:$0xff]
      %vm197 = vcmp.lt.s32.totalorder %v194, 8
      %vm198 = vcmp.lt.s32.totalorder %v195, 8
      %v199 = vsel %vm197, %v160, 0.0
      %v200 = vsel %vm198, %v161, 0.0
      %vm201 = vcmask 7168
      %v202 = vsel %vm201, %v199, 0.0
      %v203 = vsel %vm201, %v200, 0.0
      %v204 = vadd.f32 %v202, %v203
      %205 = vadd.xlane.f32.xlu0 %v204
      %v206 = vpop.xlane.xlu0 %205
      %v207 = vrot.slane %v206, 4
      %v208 = vadd.f32 %v206, %v207
      %v209 = vrot.slane %v208, 2
      %v210 = vadd.f32 %v208, %v209
      %v211 = vrot.slane %v210, 1
      %v212 = vadd.f32 %v210, %v211
      %s213 = vtos %v212
      %v214 = vstv %s213
      %v215 = vadd.f32 %v196, %v214
      %216 = vst [vmem:[#allocation3] sm:$0xff] %v215
    $region25: #{tpu_custom_call.1} parent=1 // pred_fallthru
      _
    // Predicated region
    $region26: #{tpu_custom_call.1} parent=1 // pred_check
      _
    $region27: #{tpu_custom_call.1} parent=1 // pred_check_branch
      %218 = sbr.rel (0) target = $region29
    $region28: #{tpu_custom_call.1} parent=1 // pred_region
      %s220 = ssub.s32 128, 128
      %221 = vsyncadd [#allocation4], %s220
      %s223 = sshll.u32 [#allocation3], 4
      %s224 = int_to_ptr.vmem [resolvable:$true] %s223
      %226 = dma.vmem_to_hbm [thread:$0]  %s224, 128, %s3, [#allocation4]
    $region29: #{tpu_custom_call.1} parent=1 // pred_fallthru
      _
    // Predicated region
    $region30: #{tpu_custom_call.1} parent=1 // pred_check
      _
    $region31: #{tpu_custom_call.1} parent=1 // pred_check_branch
      %228 = sbr.rel (0) target = $region33
    $region32: #{tpu_custom_call.1} parent=1 // pred_region
      %229 = dma.done [#allocation4], 128
    $region33: #{tpu_custom_call.1} parent=1 // pred_fallthru
      _
    %230 = vsyncpa [#allocation4], 1

</llo_original>
